<compile_context>
chip_gen: v7x
topology: tpu7x:2x2x1
jax: 0.10.0
libtpu: 0.0.40
codegen_flags: <defaults>
</compile_context>

<pallas_src>
import math

import jax
import jax.numpy as jnp
from jax.experimental import pallas as pl
from jax.experimental.pallas import tpu as pltpu

_BN_EPS = 1e-5
_NEG_SLOPE = 0.1
_LANE = 128
_VMEM_LIMIT = 48 * 1024 * 1024  # leave headroom under v7x's 64 MiB physical VMEM


# ----------------------------------------------------------------------------
# Kernels
# ----------------------------------------------------------------------------
def _fused_hidden_kernel(x_ref, w_ref, gamma_ref, beta_ref, o_ref, acc_ref):
    """out = leaky_relu(batchnorm(x @ W)) for one (N, tn) feature tile.

    Grid = (H//tn, K//tk); K is the last ("arbitrary") axis and accumulates into
    the f32 VMEM scratch.  The Linear bias is intentionally omitted: it is
    exactly cancelled by the BatchNorm mean subtraction.
    """
    k = pl.program_id(1)

    @pl.when(k == 0)
    def _():
        acc_ref[...] = jnp.zeros_like(acc_ref)

    # MXU matmul in bf16 with f32 accumulation.
    acc_ref[...] += jnp.dot(
        x_ref[...].astype(jnp.bfloat16),
        w_ref[...],  # already bf16
        preferred_element_type=jnp.float32,
    )

    @pl.when(k == pl.num_programs(1) - 1)
    def _():
        y = acc_ref[...]                                            # (N, tn) f32
        # BatchNorm1d (training mode): batch mean / biased batch variance,
        # folded into a single per-feature scale & shift.
        mean = jnp.mean(y, axis=0, keepdims=True)                   # (1, tn)
        var = jnp.mean(jnp.square(y - mean), axis=0, keepdims=True) # biased var
        scale = gamma_ref[...] * jax.lax.rsqrt(var + _BN_EPS)       # (1, tn)
        shift = beta_ref[...] - scale * mean
        z = y * scale + shift
        # LeakyReLU(0.1); hidden activations stored bf16 (halves HBM traffic).
        o_ref[...] = jnp.where(z > 0, z, _NEG_SLOPE * z).astype(o_ref.dtype)


def _linear_kernel(x_ref, w_ref, b_ref, o_ref, acc_ref):
    """Final layer: out = x @ W + b (no BN / activation), f32 output."""
    k = pl.program_id(1)

    @pl.when(k == 0)
    def _():
        acc_ref[...] = jnp.zeros_like(acc_ref)

    acc_ref[...] += jnp.dot(
        x_ref[...].astype(jnp.bfloat16),
        w_ref[...],
        preferred_element_type=jnp.float32,
    )

    @pl.when(k == pl.num_programs(1) - 1)
    def _():
        o_ref[...] = (acc_ref[...] + b_ref[...]).astype(o_ref.dtype)


# ----------------------------------------------------------------------------
# Wrappers
# ----------------------------------------------------------------------------
def _round_up(v, m):
    return ((v + m - 1) // m) * m


def _pick_tile(dim):
    # dim is always a multiple of 128 after padding; prefer large lane tiles.
    for t in (512, 256, 128):
        if dim % t == 0:
            return t
    return dim


def _compiler_params():
    return pltpu.CompilerParams(
        dimension_semantics=("parallel", "arbitrary"),
        vmem_limit_bytes=_VMEM_LIMIT,
    )


def fused_linear_bn_lrelu(x, w_bf16, gamma, beta):
    n, kp = x.shape
    kp_w, hp = w_bf16.shape
    assert kp == kp_w
    tk = _pick_tile(kp)
    tn = _pick_tile(hp)
    grid = (hp // tn, kp // tk)
    return pl.pallas_call(
        _fused_hidden_kernel,
        out_shape=jax.ShapeDtypeStruct((n, hp), jnp.bfloat16),
        grid_spec=pltpu.PrefetchScalarGridSpec(
            num_scalar_prefetch=0,
            grid=grid,
            in_specs=[
                pl.BlockSpec((n, tk), lambda j, k: (0, k)),     # x
                pl.BlockSpec((tk, tn), lambda j, k: (k, j)),    # W (bf16)
                pl.BlockSpec((1, tn), lambda j, k: (0, j)),     # gamma
                pl.BlockSpec((1, tn), lambda j, k: (0, j)),     # beta
            ],
            out_specs=pl.BlockSpec((n, tn), lambda j, k: (0, j)),
            scratch_shapes=[pltpu.VMEM((n, tn), jnp.float32)],
        ),
        compiler_params=_compiler_params(),
    )(x, w_bf16, gamma, beta)


def linear(x, w_bf16, b):
    n, kp = x.shape
    kp_w, hp = w_bf16.shape
    assert kp == kp_w
    tk = _pick_tile(kp)
    tn = _pick_tile(hp)
    grid = (hp // tn, kp // tk)
    return pl.pallas_call(
        _linear_kernel,
        out_shape=jax.ShapeDtypeStruct((n, hp), jnp.float32),
        grid_spec=pltpu.PrefetchScalarGridSpec(
            num_scalar_prefetch=0,
            grid=grid,
            in_specs=[
                pl.BlockSpec((n, tk), lambda j, k: (0, k)),     # x
                pl.BlockSpec((tk, tn), lambda j, k: (k, j)),    # W (bf16)
                pl.BlockSpec((1, tn), lambda j, k: (0, j)),     # bias
            ],
            out_specs=pl.BlockSpec((n, tn), lambda j, k: (0, j)),
            scratch_shapes=[pltpu.VMEM((n, tn), jnp.float32)],
        ),
        compiler_params=_compiler_params(),
    )(x, w_bf16, b)


# ----------------------------------------------------------------------------
# Parameters (match torch.nn.Linear / BatchNorm1d defaults) + kernel prep
# ----------------------------------------------------------------------------
def init_mlp_params(key, input_channels, hidden_channels, output_channels,
                    num_layers=1):
    dims = []
    if num_layers == 1:
        dims.append((input_channels, output_channels))
    else:
        dims.append((input_channels, hidden_channels))
        for _ in range(num_layers - 2):
            dims.append((hidden_channels, hidden_channels))
        dims.append((hidden_channels, output_channels))

    params = {"linears": [], "bns": []}
    for i, (fan_in, fan_out) in enumerate(dims):
        key, kw, kb = jax.random.split(key, 3)
        bound = 1.0 / math.sqrt(fan_in)
        w = jax.random.uniform(kw, (fan_in, fan_out), jnp.float32, -bound, bound)
        b = jax.random.uniform(kb, (1, fan_out), jnp.float32, -bound, bound)
        params["linears"].append((w, b))
        if i < num_layers - 1:
            params["bns"].append((jnp.ones((1, fan_out), jnp.float32),
                                  jnp.zeros((1, fan_out), jnp.float32)))
    return params


def _pad_to(a, rows, cols, value=0.0):
    pr, pc = rows - a.shape[0], cols - a.shape[1]
    if pr == 0 and pc == 0:
        return a
    return jnp.pad(a, ((0, pr), (0, pc)), constant_values=value)


def prepare_params(params):
    """Pad feature dims to multiples of 128, cast weights to bf16 (done once)."""
    num_layers = len(params["linears"])
    prepped = {"hidden": [], "final": None, "in_pad": None, "out_channels": None}
    for i in range(num_layers - 1):
        w, _b = params["linears"][i]          # hidden bias dropped (BN cancels it)
        gamma, beta = params["bns"][i]
        kp = _round_up(w.shape[0], _LANE)
        hp = _round_up(w.shape[1], _LANE)
        prepped["hidden"].append((
            _pad_to(w, kp, hp).astype(jnp.bfloat16),
            _pad_to(gamma, 1, hp, value=1.0),
            _pad_to(beta, 1, hp),
        ))
        if i == 0:
            prepped["in_pad"] = kp
    w, b = params["linears"][-1]
    kp = _round_up(w.shape[0], _LANE)
    hp = _round_up(w.shape[1], _LANE)
    prepped["final"] = (_pad_to(w, kp, hp).astype(jnp.bfloat16), _pad_to(b, 1, hp))
    if num_layers == 1:
        prepped["in_pad"] = kp
    prepped["out_channels"] = w.shape[1]
    return prepped


def mlp_forward(prepped, x):
    n = x.shape[0]
    x = _pad_to(x, n, prepped["in_pad"])
    for (w_p, gamma_p, beta_p) in prepped["hidden"]:
        x = fused_linear_bn_lrelu(x, w_p, gamma_p, beta_p)
    w_p, b_p = prepped["final"]
    y = linear(x, w_p, b_p)
    return y[:, :prepped["out_channels"]]


# ----------------------------------------------------------------------------
# Pure-JAX references
# ----------------------------------------------------------------------------
def mlp_forward_ref(params, x, cast_dtype=None):
    """cast_dtype=None -> exact f32 PyTorch semantics;
       cast_dtype=bf16 -> mimics the kernel's bf16 MXU / bf16 activation storage."""
    def _mm(a, w):
        if cast_dtype is not None:
            a = a.astype(cast_dtype)
            w = w.astype(cast_dtype)
        return jnp.dot(a, w, preferred_element_type=jnp.float32)

    num_layers = len(params["linears"])
    h = x
    for i in range(num_layers - 1):
        w, b = params["linears"][i]
        gamma, beta = params["bns"][i]
        y = _mm(h, w) + b
        mean = jnp.mean(y, axis=0, keepdims=True)
        var = jnp.mean(jnp.square(y - mean), axis=0, keepdims=True)
        z = gamma * (y - mean) * jax.lax.rsqrt(var + _BN_EPS) + beta
        h = jnp.where(z > 0, z, _NEG_SLOPE * z)
        if cast_dtype is not None:
            h = h.astype(cast_dtype).astype(jnp.float32)
    w, b = params["linears"][-1]
    return _mm(h, w) + b


if __name__ == "__main__":
    key = jax.random.PRNGKey(0)
    k_params, k_x = jax.random.split(key)

    batch = 8
    input_channels = 16
    hidden_channels = 32
    output_channels = 8
    num_layers = 3

    params = init_mlp_params(k_params, input_channels, hidden_channels,
                             output_channels, num_layers=num_layers)
    x = jax.random.normal(k_x, (batch, input_channels), jnp.float32)

    prepped = prepare_params(params)
    fwd = jax.jit(lambda xx: mlp_forward(prepped, xx))
    out = jax.block_until_ready(fwd(x))

    ref_mxu = mlp_forward_ref(params, x, cast_dtype=jnp.bfloat16)  # kernel-precision ref
    ref_f32 = mlp_forward_ref(params, x)                           # exact module semantics

    assert out.shape == (batch, output_channels)
    assert jnp.allclose(out, ref_mxu, atol=1e-2, rtol=1e-2)
    assert jnp.allclose(out, ref_f32, atol=1e-1, rtol=1e-1)

    print("KERNEL_OK")
</pallas_src>

<mosaic_0001>
module attributes {stable_mosaic.version = 11 : i64} {
  func.func @_fused_hidden_kernel(%arg0: i32, %arg1: i32, %arg2: memref<8x128xbf16, #tpu.memory_space<vmem>>, %arg3: memref<128x128xbf16, #tpu.memory_space<vmem>>, %arg4: memref<1x128xf32, #tpu.memory_space<vmem>>, %arg5: memref<1x128xf32, #tpu.memory_space<vmem>>, %arg6: memref<8x128xbf16, #tpu.memory_space<vmem>>, %arg7: memref<8x128xf32, #tpu.memory_space<vmem>>) attributes {dimension_semantics = [#tpu.dimension_semantics<parallel>, #tpu.dimension_semantics<arbitrary>], iteration_bounds = array<i64: 1, 1>, scalar_prefetch = 0 : i64, scratch_operands = 1 : i64, tpu.core_type = #tpu.core_type<tc>, window_params = [{transform_indices = @transform_0, window_bounds = array<i64: 8, 128>}, {transform_indices = @transform_1, window_bounds = array<i64: 128, 128>}, {transform_indices = @transform_2, window_bounds = array<i64: 1, 128>}, {transform_indices = @transform_3, window_bounds = array<i64: 1, 128>}, {transform_indices = @transform_4, window_bounds = array<i64: 8, 128>}]} {
    %c0_i32 = arith.constant 0 : i32
    %0 = arith.cmpi eq, %arg1, %c0_i32 : i32
    %1 = arith.extui %0 : i1 to i32
    %c0_i32_0 = arith.constant 0 : i32
    %2 = arith.cmpi ne, %1, %c0_i32_0 : i32
    scf.if %2 {
      %cst_10 = arith.constant 0.000000e+00 : f32
      %12 = vector.broadcast %cst_10 : f32 to vector<8x128xf32>
      %c0_11 = arith.constant 0 : index
      %c0_12 = arith.constant 0 : index
      %13 = vector.load %arg7[%c0_11, %c0_12] : memref<8x128xf32, #tpu.memory_space<vmem>>, vector<8x128xf32>
      tpu.vector_store %arg7[%c0_11, %c0_12], %12 {strides = array<i32>} : memref<8x128xf32, #tpu.memory_space<vmem>>, vector<8x128xf32>,
    } else {
    }
    %c0 = arith.constant 0 : index
    %c0_1 = arith.constant 0 : index
    %3 = vector.load %arg7[%c0, %c0_1] : memref<8x128xf32, #tpu.memory_space<vmem>>, vector<8x128xf32>
    %c0_2 = arith.constant 0 : index
    %c0_3 = arith.constant 0 : index
    %4 = vector.load %arg2[%c0_2, %c0_3] : memref<8x128xbf16, #tpu.memory_space<vmem>>, vector<8x128xbf16>
    %c0_4 = arith.constant 0 : index
    %c0_5 = arith.constant 0 : index
    %5 = vector.load %arg3[%c0_4, %c0_5] : memref<128x128xbf16, #tpu.memory_space<vmem>>, vector<128x128xbf16>
    %cst = arith.constant dense<0.000000e+00> : vector<8x128xf32>
    %6 = tpu.matmul %4, %5, %cst {dimension_numbers = #tpu.dot_dimension_numbers<[1], [0], [0], [1], [0, 0, 1, 1], [], []>} : vector<8x128xbf16>, vector<128x128xbf16>, vector<8x128xf32> -> vector<8x128xf32>
    %7 = arith.addf %3, %6 : vector<8x128xf32>
    %c0_6 = arith.constant 0 : index
    %c0_7 = arith.constant 0 : index
    %8 = vector.load %arg7[%c0_6, %c0_7] : memref<8x128xf32, #tpu.memory_space<vmem>>, vector<8x128xf32>
    tpu.vector_store %arg7[%c0_6, %c0_7], %7 {strides = array<i32>} : memref<8x128xf32, #tpu.memory_space<vmem>>, vector<8x128xf32>,
    %c0_i32_8 = arith.constant 0 : i32
    %9 = arith.cmpi eq, %arg1, %c0_i32_8 : i32
    %10 = arith.extui %9 : i1 to i32
    %c0_i32_9 = arith.constant 0 : i32
    %11 = arith.cmpi ne, %10, %c0_i32_9 : i32
    scf.if %11 {
      %c0_10 = arith.constant 0 : index
      %c0_11 = arith.constant 0 : index
      %12 = vector.load %arg7[%c0_10, %c0_11] : memref<8x128xf32, #tpu.memory_space<vmem>>, vector<8x128xf32>
      %cst_12 = arith.constant dense<0.000000e+00> : vector<128xf32>
      %13 = vector.multi_reduction <add>, %12, %cst_12 [0] : vector<8x128xf32> to vector<128xf32>
      %14 = vector.shape_cast %13 : vector<128xf32> to vector<1x128xf32>
      %cst_13 = arith.constant 8.000000e+00 : f32
      %15 = vector.broadcast %cst_13 : f32 to vector<1x128xf32>
      %16 = arith.divf %14, %15 : vector<1x128xf32>
      %17 = vector.broadcast %16 : vector<1x128xf32> to vector<8x128xf32>
      %18 = arith.subf %12, %17 : vector<8x128xf32>
      %19 = arith.mulf %18, %18 : vector<8x128xf32>
      %cst_14 = arith.constant dense<0.000000e+00> : vector<128xf32>
      %20 = vector.multi_reduction <add>, %19, %cst_14 [0] : vector<8x128xf32> to vector<128xf32>
      %21 = vector.shape_cast %20 : vector<128xf32> to vector<1x128xf32>
      %cst_15 = arith.constant 8.000000e+00 : f32
      %22 = vector.broadcast %cst_15 : f32 to vector<1x128xf32>
      %23 = arith.divf %21, %22 : vector<1x128xf32>
      %c0_16 = arith.constant 0 : index
      %c0_17 = arith.constant 0 : index
      %24 = vector.load %arg4[%c0_16, %c0_17] : memref<1x128xf32, #tpu.memory_space<vmem>>, vector<1x128xf32>
      %cst_18 = arith.constant 9.99999974E-6 : f32
      %25 = vector.broadcast %cst_18 : f32 to vector<1x128xf32>
      %26 = arith.addf %23, %25 : vector<1x128xf32>
      %27 = math.rsqrt %26 : vector<1x128xf32>
      %28 = arith.mulf %24, %27 : vector<1x128xf32>
      %c0_19 = arith.constant 0 : index
      %c0_20 = arith.constant 0 : index
      %29 = vector.load %arg5[%c0_19, %c0_20] : memref<1x128xf32, #tpu.memory_space<vmem>>, vector<1x128xf32>
      %30 = arith.mulf %28, %16 : vector<1x128xf32>
      %31 = arith.subf %29, %30 : vector<1x128xf32>
      %32 = vector.broadcast %28 : vector<1x128xf32> to vector<8x128xf32>
      %33 = arith.mulf %12, %32 : vector<8x128xf32>
      %34 = vector.broadcast %31 : vector<1x128xf32> to vector<8x128xf32>
      %35 = arith.addf %33, %34 : vector<8x128xf32>
      %cst_21 = arith.constant 0.000000e+00 : f32
      %36 = vector.broadcast %cst_21 : f32 to vector<8x128xf32>
      %37 = arith.cmpf ogt, %35, %36 : vector<8x128xf32>
      %cst_22 = arith.constant 1.000000e-01 : f32
      %38 = vector.broadcast %cst_22 : f32 to vector<8x128xf32>
      %39 = arith.mulf %38, %35 : vector<8x128xf32>
      %40 = arith.select %37, %35, %39 : vector<8x128xi1>, vector<8x128xf32>
      %41 = arith.truncf %40 : vector<8x128xf32> to vector<8x128xbf16>
      %c0_23 = arith.constant 0 : index
      %c0_24 = arith.constant 0 : index
      %42 = vector.load %arg6[%c0_23, %c0_24] : memref<8x128xbf16, #tpu.memory_space<vmem>>, vector<8x128xbf16>
      tpu.vector_store %arg6[%c0_23, %c0_24], %41 {strides = array<i32>} : memref<8x128xbf16, #tpu.memory_space<vmem>>, vector<8x128xbf16>,
    } else {
    }
    return
  }
  func.func @transform_0(%arg0: i32, %arg1: i32) -> (i32, i32) {
    %c0_i32 = arith.constant 0 : i32
    %c0_i32_0 = arith.constant 0 : i32
    return %c0_i32, %arg1 : i32, i32
  }
  func.func @transform_1(%arg0: i32, %arg1: i32) -> (i32, i32) {
    %c0_i32 = arith.constant 0 : i32
    return %arg1, %arg0 : i32, i32
  }
  func.func @transform_2(%arg0: i32, %arg1: i32) -> (i32, i32) {
    %c0_i32 = arith.constant 0 : i32
    %c0_i32_0 = arith.constant 0 : i32
    return %c0_i32, %arg0 : i32, i32
  }
  func.func @transform_3(%arg0: i32, %arg1: i32) -> (i32, i32) {
    %c0_i32 = arith.constant 0 : i32
    %c0_i32_0 = arith.constant 0 : i32
    return %c0_i32, %arg0 : i32, i32
  }
  func.func @transform_4(%arg0: i32, %arg1: i32) -> (i32, i32) {
    %c0_i32 = arith.constant 0 : i32
    %c0_i32_0 = arith.constant 0 : i32
    return %c0_i32, %arg0 : i32, i32
  }
}

module attributes {stable_mosaic.version = 11 : i64} {
  func.func @_fused_hidden_kernel(%arg0: i32, %arg1: i32, %arg2: memref<8x128xf32, #tpu.memory_space<vmem>>, %arg3: memref<128x128xbf16, #tpu.memory_space<vmem>>, %arg4: memref<1x128xf32, #tpu.memory_space<vmem>>, %arg5: memref<1x128xf32, #tpu.memory_space<vmem>>, %arg6: memref<8x128xbf16, #tpu.memory_space<vmem>>, %arg7: memref<8x128xf32, #tpu.memory_space<vmem>>) attributes {dimension_semantics = [#tpu.dimension_semantics<parallel>, #tpu.dimension_semantics<arbitrary>], iteration_bounds = array<i64: 1, 1>, scalar_prefetch = 0 : i64, scratch_operands = 1 : i64, tpu.core_type = #tpu.core_type<tc>, window_params = [{transform_indices = @transform_0, window_bounds = array<i64: 8, 128>}, {transform_indices = @transform_1, window_bounds = array<i64: 128, 128>}, {transform_indices = @transform_2, window_bounds = array<i64: 1, 128>}, {transform_indices = @transform_3, window_bounds = array<i64: 1, 128>}, {transform_indices = @transform_4, window_bounds = array<i64: 8, 128>}]} {
    %c0_i32 = arith.constant 0 : i32
    %0 = arith.cmpi eq, %arg1, %c0_i32 : i32
    %1 = arith.extui %0 : i1 to i32
    %c0_i32_0 = arith.constant 0 : i32
    %2 = arith.cmpi ne, %1, %c0_i32_0 : i32
    scf.if %2 {
      %cst_10 = arith.constant 0.000000e+00 : f32
      %13 = vector.broadcast %cst_10 : f32 to vector<8x128xf32>
      %c0_11 = arith.constant 0 : index
      %c0_12 = arith.constant 0 : index
      %14 = vector.load %arg7[%c0_11, %c0_12] : memref<8x128xf32, #tpu.memory_space<vmem>>, vector<8x128xf32>
      tpu.vector_store %arg7[%c0_11, %c0_12], %13 {strides = array<i32>} : memref<8x128xf32, #tpu.memory_space<vmem>>, vector<8x128xf32>,
    } else {
    }
    %c0 = arith.constant 0 : index
    %c0_1 = arith.constant 0 : index
    %3 = vector.load %arg7[%c0, %c0_1] : memref<8x128xf32, #tpu.memory_space<vmem>>, vector<8x128xf32>
    %c0_2 = arith.constant 0 : index
    %c0_3 = arith.constant 0 : index
    %4 = vector.load %arg2[%c0_2, %c0_3] : memref<8x128xf32, #tpu.memory_space<vmem>>, vector<8x128xf32>
    %5 = arith.truncf %4 : vector<8x128xf32> to vector<8x128xbf16>
    %c0_4 = arith.constant 0 : index
    %c0_5 = arith.constant 0 : index
    %6 = vector.load %arg3[%c0_4, %c0_5] : memref<128x128xbf16, #tpu.memory_space<vmem>>, vector<128x128xbf16>
    %cst = arith.constant dense<0.000000e+00> : vector<8x128xf32>
    %7 = tpu.matmul %5, %6, %cst {dimension_numbers = #tpu.dot_dimension_numbers<[1], [0], [0], [1], [0, 0, 1, 1], [], []>} : vector<8x128xbf16>, vector<128x128xbf16>, vector<8x128xf32> -> vector<8x128xf32>
    %8 = arith.addf %3, %7 : vector<8x128xf32>
    %c0_6 = arith.constant 0 : index
    %c0_7 = arith.constant 0 : index
    %9 = vector.load %arg7[%c0_6, %c0_7] : memref<8x128xf32, #tpu.memory_space<vmem>>, vector<8x128xf32>
    tpu.vector_store %arg7[%c0_6, %c0_7], %8 {strides = array<i32>} : memref<8x128xf32, #tpu.memory_space<vmem>>, vector<8x128xf32>,
    %c0_i32_8 = arith.constant 0 : i32
    %10 = arith.cmpi eq, %arg1, %c0_i32_8 : i32
    %11 = arith.extui %10 : i1 to i32
    %c0_i32_9 = arith.constant 0 : i32
    %12 = arith.cmpi ne, %11, %c0_i32_9 : i32
    scf.if %12 {
      %c0_10 = arith.constant 0 : index
      %c0_11 = arith.constant 0 : index
      %13 = vector.load %arg7[%c0_10, %c0_11] : memref<8x128xf32, #tpu.memory_space<vmem>>, vector<8x128xf32>
      %cst_12 = arith.constant dense<0.000000e+00> : vector<128xf32>
      %14 = vector.multi_reduction <add>, %13, %cst_12 [0] : vector<8x128xf32> to vector<128xf32>
      %15 = vector.shape_cast %14 : vector<128xf32> to vector<1x128xf32>
      %cst_13 = arith.constant 8.000000e+00 : f32
      %16 = vector.broadcast %cst_13 : f32 to vector<1x128xf32>
      %17 = arith.divf %15, %16 : vector<1x128xf32>
      %18 = vector.broadcast %17 : vector<1x128xf32> to vector<8x128xf32>
      %19 = arith.subf %13, %18 : vector<8x128xf32>
      %20 = arith.mulf %19, %19 : vector<8x128xf32>
      %cst_14 = arith.constant dense<0.000000e+00> : vector<128xf32>
      %21 = vector.multi_reduction <add>, %20, %cst_14 [0] : vector<8x128xf32> to vector<128xf32>
      %22 = vector.shape_cast %21 : vector<128xf32> to vector<1x128xf32>
      %cst_15 = arith.constant 8.000000e+00 : f32
      %23 = vector.broadcast %cst_15 : f32 to vector<1x128xf32>
      %24 = arith.divf %22, %23 : vector<1x128xf32>
      %c0_16 = arith.constant 0 : index
      %c0_17 = arith.constant 0 : index
      %25 = vector.load %arg4[%c0_16, %c0_17] : memref<1x128xf32, #tpu.memory_space<vmem>>, vector<1x128xf32>
      %cst_18 = arith.constant 9.99999974E-6 : f32
      %26 = vector.broadcast %cst_18 : f32 to vector<1x128xf32>
      %27 = arith.addf %24, %26 : vector<1x128xf32>
      %28 = math.rsqrt %27 : vector<1x128xf32>
      %29 = arith.mulf %25, %28 : vector<1x128xf32>
      %c0_19 = arith.constant 0 : index
      %c0_20 = arith.constant 0 : index
      %30 = vector.load %arg5[%c0_19, %c0_20] : memref<1x128xf32, #tpu.memory_space<vmem>>, vector<1x128xf32>
      %31 = arith.mulf %29, %17 : vector<1x128xf32>
      %32 = arith.subf %30, %31 : vector<1x128xf32>
      %33 = vector.broadcast %29 : vector<1x128xf32> to vector<8x128xf32>
      %34 = arith.mulf %13, %33 : vector<8x128xf32>
      %35 = vector.broadcast %32 : vector<1x128xf32> to vector<8x128xf32>
      %36 = arith.addf %34, %35 : vector<8x128xf32>
      %cst_21 = arith.constant 0.000000e+00 : f32
      %37 = vector.broadcast %cst_21 : f32 to vector<8x128xf32>
      %38 = arith.cmpf ogt, %36, %37 : vector<8x128xf32>
      %cst_22 = arith.constant 1.000000e-01 : f32
      %39 = vector.broadcast %cst_22 : f32 to vector<8x128xf32>
      %40 = arith.mulf %39, %36 : vector<8x128xf32>
      %41 = arith.select %38, %36, %40 : vector<8x128xi1>, vector<8x128xf32>
      %42 = arith.truncf %41 : vector<8x128xf32> to vector<8x128xbf16>
      %c0_23 = arith.constant 0 : index
      %c0_24 = arith.constant 0 : index
      %43 = vector.load %arg6[%c0_23, %c0_24] : memref<8x128xbf16, #tpu.memory_space<vmem>>, vector<8x128xbf16>
      tpu.vector_store %arg6[%c0_23, %c0_24], %42 {strides = array<i32>} : memref<8x128xbf16, #tpu.memory_space<vmem>>, vector<8x128xbf16>,
    } else {
    }
    return
  }
  func.func @transform_0(%arg0: i32, %arg1: i32) -> (i32, i32) {
    %c0_i32 = arith.constant 0 : i32
    %c0_i32_0 = arith.constant 0 : i32
    return %c0_i32, %arg1 : i32, i32
  }
  func.func @transform_1(%arg0: i32, %arg1: i32) -> (i32, i32) {
    %c0_i32 = arith.constant 0 : i32
    return %arg1, %arg0 : i32, i32
  }
  func.func @transform_2(%arg0: i32, %arg1: i32) -> (i32, i32) {
    %c0_i32 = arith.constant 0 : i32
    %c0_i32_0 = arith.constant 0 : i32
    return %c0_i32, %arg0 : i32, i32
  }
  func.func @transform_3(%arg0: i32, %arg1: i32) -> (i32, i32) {
    %c0_i32 = arith.constant 0 : i32
    %c0_i32_0 = arith.constant 0 : i32
    return %c0_i32, %arg0 : i32, i32
  }
  func.func @transform_4(%arg0: i32, %arg1: i32) -> (i32, i32) {
    %c0_i32 = arith.constant 0 : i32
    %c0_i32_0 = arith.constant 0 : i32
    return %c0_i32, %arg0 : i32, i32
  }
}

module attributes {stable_mosaic.version = 11 : i64} {
  func.func @_linear_kernel(%arg0: i32, %arg1: i32, %arg2: memref<8x128xbf16, #tpu.memory_space<vmem>>, %arg3: memref<128x128xbf16, #tpu.memory_space<vmem>>, %arg4: memref<1x128xf32, #tpu.memory_space<vmem>>, %arg5: memref<8x128xf32, #tpu.memory_space<vmem>>, %arg6: memref<8x128xf32, #tpu.memory_space<vmem>>) attributes {dimension_semantics = [#tpu.dimension_semantics<parallel>, #tpu.dimension_semantics<arbitrary>], iteration_bounds = array<i64: 1, 1>, scalar_prefetch = 0 : i64, scratch_operands = 1 : i64, tpu.core_type = #tpu.core_type<tc>, window_params = [{transform_indices = @transform_0, window_bounds = array<i64: 8, 128>}, {transform_indices = @transform_1, window_bounds = array<i64: 128, 128>}, {transform_indices = @transform_2, window_bounds = array<i64: 1, 128>}, {transform_indices = @transform_3, window_bounds = array<i64: 8, 128>}]} {
    %c0_i32 = arith.constant 0 : i32
    %0 = arith.cmpi eq, %arg1, %c0_i32 : i32
    %1 = arith.extui %0 : i1 to i32
    %c0_i32_0 = arith.constant 0 : i32
    %2 = arith.cmpi ne, %1, %c0_i32_0 : i32
    scf.if %2 {
      %cst_10 = arith.constant 0.000000e+00 : f32
      %12 = vector.broadcast %cst_10 : f32 to vector<8x128xf32>
      %c0_11 = arith.constant 0 : index
      %c0_12 = arith.constant 0 : index
      %13 = vector.load %arg6[%c0_11, %c0_12] : memref<8x128xf32, #tpu.memory_space<vmem>>, vector<8x128xf32>
      tpu.vector_store %arg6[%c0_11, %c0_12], %12 {strides = array<i32>} : memref<8x128xf32, #tpu.memory_space<vmem>>, vector<8x128xf32>,
    } else {
    }
    %c0 = arith.constant 0 : index
    %c0_1 = arith.constant 0 : index
    %3 = vector.load %arg6[%c0, %c0_1] : memref<8x128xf32, #tpu.memory_space<vmem>>, vector<8x128xf32>
    %c0_2 = arith.constant 0 : index
    %c0_3 = arith.constant 0 : index
    %4 = vector.load %arg2[%c0_2, %c0_3] : memref<8x128xbf16, #tpu.memory_space<vmem>>, vector<8x128xbf16>
    %c0_4 = arith.constant 0 : index
    %c0_5 = arith.constant 0 : index
    %5 = vector.load %arg3[%c0_4, %c0_5] : memref<128x128xbf16, #tpu.memory_space<vmem>>, vector<128x128xbf16>
    %cst = arith.constant dense<0.000000e+00> : vector<8x128xf32>
    %6 = tpu.matmul %4, %5, %cst {dimension_numbers = #tpu.dot_dimension_numbers<[1], [0], [0], [1], [0, 0, 1, 1], [], []>} : vector<8x128xbf16>, vector<128x128xbf16>, vector<8x128xf32> -> vector<8x128xf32>
    %7 = arith.addf %3, %6 : vector<8x128xf32>
    %c0_6 = arith.constant 0 : index
    %c0_7 = arith.constant 0 : index
    %8 = vector.load %arg6[%c0_6, %c0_7] : memref<8x128xf32, #tpu.memory_space<vmem>>, vector<8x128xf32>
    tpu.vector_store %arg6[%c0_6, %c0_7], %7 {strides = array<i32>} : memref<8x128xf32, #tpu.memory_space<vmem>>, vector<8x128xf32>,
    %c0_i32_8 = arith.constant 0 : i32
    %9 = arith.cmpi eq, %arg1, %c0_i32_8 : i32
    %10 = arith.extui %9 : i1 to i32
    %c0_i32_9 = arith.constant 0 : i32
    %11 = arith.cmpi ne, %10, %c0_i32_9 : i32
    scf.if %11 {
      %c0_10 = arith.constant 0 : index
      %c0_11 = arith.constant 0 : index
      %12 = vector.load %arg6[%c0_10, %c0_11] : memref<8x128xf32, #tpu.memory_space<vmem>>, vector<8x128xf32>
      %c0_12 = arith.constant 0 : index
      %c0_13 = arith.constant 0 : index
      %13 = vector.load %arg4[%c0_12, %c0_13] : memref<1x128xf32, #tpu.memory_space<vmem>>, vector<1x128xf32>
      %14 = vector.broadcast %13 : vector<1x128xf32> to vector<8x128xf32>
      %15 = arith.addf %12, %14 : vector<8x128xf32>
      %c0_14 = arith.constant 0 : index
      %c0_15 = arith.constant 0 : index
      %16 = vector.load %arg5[%c0_14, %c0_15] : memref<8x128xf32, #tpu.memory_space<vmem>>, vector<8x128xf32>
      tpu.vector_store %arg5[%c0_14, %c0_15], %15 {strides = array<i32>} : memref<8x128xf32, #tpu.memory_space<vmem>>, vector<8x128xf32>,
    } else {
    }
    return
  }
  func.func @transform_0(%arg0: i32, %arg1: i32) -> (i32, i32) {
    %c0_i32 = arith.constant 0 : i32
    %c0_i32_0 = arith.constant 0 : i32
    return %c0_i32, %arg1 : i32, i32
  }
  func.func @transform_1(%arg0: i32, %arg1: i32) -> (i32, i32) {
    %c0_i32 = arith.constant 0 : i32
    return %arg1, %arg0 : i32, i32
  }
  func.func @transform_2(%arg0: i32, %arg1: i32) -> (i32, i32) {
    %c0_i32 = arith.constant 0 : i32
    %c0_i32_0 = arith.constant 0 : i32
    return %c0_i32, %arg0 : i32, i32
  }
  func.func @transform_3(%arg0: i32, %arg1: i32) -> (i32, i32) {
    %c0_i32 = arith.constant 0 : i32
    %c0_i32_0 = arith.constant 0 : i32
    return %c0_i32, %arg0 : i32, i32
  }
}

</mosaic_0001>

<llo_original>
// kernel: _lambda_.5
$region0: #{_lambda_.5}
  #allocation0 [shape = 'u32[]', space=smem, size = 0x4, offset = 0x4, fixed_abs, tag = 'smem constant byte address 0x4 - core index']
  #allocation1 [shape = 'u32[144,128]{1,0:T(1,128)}', space=vmem, size = 0x12000, scoped, tag = 'internal scratch']
  #allocation2 [shape = 'f32[8,128]{1,0:T(8,128)}', space=vmem, size = 0x1000, scoped, tag = 'scratch operand']
  %s0 = inlined_call_operand.vmem [shape: bf16[8,128], index: 0, kind: input, shape index: {}]
  %s1 = inlined_call_operand.vmem [shape: bf16[128,128], index: 1, kind: input, shape index: {}]
  %s2 = inlined_call_operand.vmem [shape: f32[1,128], index: 2, kind: input, shape index: {}]
  %s3 = inlined_call_operand.hbm [shape: f32[8,128], index: 3, kind: output, shape index: {}]
  %s4 = sld [smem:[#allocation0]]
  $region30: #{_lambda_.5} parent=0
    _
  %s6 = ssub.s32 1, %s4
  %s7 = scalar_select 0, %s6, %s4
  $region1: #{_lambda_.5} parent=0
    #allocation3 [shape = 'u8[4096]{0}', space=vmem, size = 0x1000, scoped, tag = 'output window, operand 0, single buffered']
    #allocation4 [shape = 's32[1]{0}', space=sflag, size = 0x4, scoped, tag = 'scoped memory for _lambda_.5']
    %8 = vsyncpa [#allocation4], 0
    // Predicated region
    $region2: #{_lambda_.5} parent=1 // pred_check
      _
    $region3: #{_lambda_.5} parent=1 // pred_check_branch
      %10 = sbr.rel (0) target = $region5
    $region4: #{_lambda_.5} parent=1 // pred_region
      _
    $region5: #{_lambda_.5} parent=1 // pred_fallthru
      _
    // Predicated region
    $region6: #{_lambda_.5} parent=1 // pred_check
      _
    $region7: #{_lambda_.5} parent=1 // pred_check_branch
      %12 = sbr.rel (0) target = $region9
    $region8: #{_lambda_.5} parent=1 // pred_region
      _
    $region9: #{_lambda_.5} parent=1 // pred_fallthru
      _
    // Predicated region
    $region10: #{_lambda_.5} parent=1 // pred_check
      _
    $region11: #{_lambda_.5} parent=1 // pred_check_branch
      %14 = sbr.rel (0) target = $region13
    $region12: #{_lambda_.5} parent=1 // pred_region
      _
    $region13: #{_lambda_.5} parent=1 // pred_fallthru
      _
    %p16 = scmp.eq.s32.totalorder 0, 0
    // Predicated region
    $region14: #{_lambda_.5} parent=1 // pred_check
      %p17 = pneg %p16
    $region15: #{_lambda_.5} parent=1 // pred_check_branch
      %19 = sbr.rel (%p17) target = $region17
    $region16: #{_lambda_.5} parent=1 // pred_region
      %20 = vst [vmem:[#allocation2] sm:$0xff] 0.0
    $region17: #{_lambda_.5} parent=1 // pred_fallthru
      _
    %v21 = vld [vmem:[#allocation2] sm:$0xff]
    %v22 = vld [vmem:[%s0] sm:$0xf]
    %v23 = vld [vmem:[%s1] sm:$0xf]
    %v24 = vld [vmem:[%s1 + $0x4] sm:$0xf]
    %v25 = vld [vmem:[%s1 + $0x8] sm:$0xf]
    %v26 = vld [vmem:[%s1 + $0xc] sm:$0xf]
    %v27 = vld [vmem:[%s1 + $0x10] sm:$0xf]
    %v28 = vld [vmem:[%s1 + $0x14] sm:$0xf]
    %v29 = vld [vmem:[%s1 + $0x18] sm:$0xf]
    %v30 = vld [vmem:[%s1 + $0x1c] sm:$0xf]
    %v31 = vld [vmem:[%s1 + $0x20] sm:$0xf]
    %v32 = vld [vmem:[%s1 + $0x24] sm:$0xf]
    %v33 = vld [vmem:[%s1 + $0x28] sm:$0xf]
    %v34 = vld [vmem:[%s1 + $0x2c] sm:$0xf]
    %v35 = vld [vmem:[%s1 + $0x30] sm:$0xf]
    %v36 = vld [vmem:[%s1 + $0x34] sm:$0xf]
    %v37 = vld [vmem:[%s1 + $0x38] sm:$0xf]
    %v38 = vld [vmem:[%s1 + $0x3c] sm:$0xf]
    %v55 = vunpack.c.l.b16 %v23
    %v56 = vunpack.c.l.b16 %v24
    %v57 = vunpack.c.l.b16 %v25
    %v58 = vunpack.c.l.b16 %v26
    %v59 = vunpack.c.l.b16 %v27
    %v60 = vunpack.c.l.b16 %v28
    %v61 = vunpack.c.l.b16 %v29
    %v62 = vunpack.c.l.b16 %v30
    %v63 = vunpack.c.l.b16 %v31
    %v64 = vunpack.c.l.b16 %v32
    %v65 = vunpack.c.l.b16 %v33
    %v66 = vunpack.c.l.b16 %v34
    %v67 = vunpack.c.l.b16 %v35
    %v68 = vunpack.c.l.b16 %v36
    %v69 = vunpack.c.l.b16 %v37
    %v70 = vunpack.c.l.b16 %v38
    %v71 = vpack.c.b16 %v56, %v55
    %v72 = vpack.c.b16 %v58, %v57
    %v73 = vpack.c.b16 %v60, %v59
    %v74 = vpack.c.b16 %v62, %v61
    %v75 = vpack.c.b16 %v64, %v63
    %v76 = vpack.c.b16 %v66, %v65
    %v77 = vpack.c.b16 %v68, %v67
    %v78 = vpack.c.b16 %v70, %v69
    %87 = vmatprep.subr.bf16.mxu0 0
    %88 = vmatpush1.bf16.msra.mxu0 %v71
    %89 = vmatprep.subr.bf16.mxu0 0
    %90 = vmatpush1.bf16.msra.mxu0 %v72
    %91 = vmatprep.subr.bf16.mxu0 0
    %92 = vmatpush1.bf16.msra.mxu0 %v73
    %93 = vmatprep.subr.bf16.mxu0 0
    %94 = vmatpush1.bf16.msra.mxu0 %v74
    %95 = vmatprep.subr.bf16.mxu0 0
    %96 = vmatpush1.bf16.msra.mxu0 %v75
    %97 = vmatprep.subr.bf16.mxu0 0
    %98 = vmatpush1.bf16.msra.mxu0 %v76
    %99 = vmatprep.subr.bf16.mxu0 0
    %100 = vmatpush1.bf16.msra.mxu0 %v77
    %101 = vmatprep.subr.bf16.mxu0 0
    %102 = vmatpush1.bf16.msra.mxu0 %v78
    %103 = vmatprep.subr.bf16.mxu0 0
    %104 = vmatpush1.bf16.msra.mxu0 0
    %105 = vmatprep.subr.bf16.mxu0 0
    %106 = vmatpush1.bf16.msra.mxu0 0
    %107 = vmatprep.subr.bf16.mxu0 0
    %108 = vmatpush1.bf16.msra.mxu0 0
    %109 = vmatprep.subr.bf16.mxu0 0
    %110 = vmatpush1.bf16.msra.mxu0 0
    %111 = vmatprep.subr.bf16.mxu0 0
    %112 = vmatpush1.bf16.msra.mxu0 0
    %113 = vmatprep.subr.bf16.mxu0 0
    %114 = vmatpush1.bf16.msra.mxu0 0
    %115 = vmatprep.subr.bf16.mxu0 0
    %116 = vmatpush1.bf16.msra.mxu0 0
    %117 = vmatprep.subr.bf16.mxu0 0
    %118 = vmatpush1.bf16.msra.mxu0 0
    %119 = vmatprep.mubr.bf16.mxu0 0
    %120 = vmatmul.mubr.bf16.gmra.mrb[0].mxu0 %v22
    %v121 = vpop.f32.mrb[0].mxu0
    %v122 = vadd.f32 0.0, %v121
    %v123 = vpop.f32.mrb[0].mxu0
    %v124 = vpop.f32.mrb[0].mxu0
    %v125 = vpop.f32.mrb[0].mxu0
    %126 = vdwg.mxu0
    %v127 = vadd.f32 %v21, %v122
    %128 = vst [vmem:[#allocation2] sm:$0xff] %v127
    // Predicated region
    $region18: #{_lambda_.5} parent=1 // pred_check
      %p129 = pneg %p16
    $region19: #{_lambda_.5} parent=1 // pred_check_branch
      %131 = sbr.rel (%p129) target = $region21
    $region20: #{_lambda_.5} parent=1 // pred_region
      %v132 = vld [vmem:[#allocation2] sm:$0xff]
      %v133 = vld [vmem:[%s2] sm:$0x1]
      %v135 = vlaneseq
      %v136 = vshrl.u32 %v135, 7
      %v137 = vsub.s32 0, %v136
      %v138 = vrot.slane %v133, %v137
      %v140 = vadd.f32 %v132, %v138
      %141 = vst [vmem:[#allocation3] sm:$0xff] %v140
    $region21: #{_lambda_.5} parent=1 // pred_fallthru
      _
    // Predicated region
    $region22: #{_lambda_.5} parent=1 // pred_check
      _
    $region23: #{_lambda_.5} parent=1 // pred_check_branch
      %143 = sbr.rel (0) target = $region25
    $region24: #{_lambda_.5} parent=1 // pred_region
      %s145 = ssub.s32 128, 128
      %146 = vsyncadd [#allocation4], %s145
      %s148 = sshll.u32 [#allocation3], 4
      %s149 = int_to_ptr.vmem [resolvable:$true] %s148
      %151 = dma.vmem_to_hbm [thread:$0]  %s149, 128, %s3, [#allocation4]
    $region25: #{_lambda_.5} parent=1 // pred_fallthru
      _
    // Predicated region
    $region26: #{_lambda_.5} parent=1 // pred_check
      _
    $region27: #{_lambda_.5} parent=1 // pred_check_branch
      %153 = sbr.rel (0) target = $region29
    $region28: #{_lambda_.5} parent=1 // pred_region
      %154 = dma.done [#allocation4], 128
    $region29: #{_lambda_.5} parent=1 // pred_fallthru
      _
    %155 = vsyncpa [#allocation4], 1

// kernel: _lambda_.3
$region0: #{_lambda_.3}
  #allocation0 [shape = 'u32[]', space=smem, size = 0x4, offset = 0x4, fixed_abs, tag = 'smem constant byte address 0x4 - core index']
  #allocation1 [shape = 'u32[144,128]{1,0:T(1,128)}', space=vmem, size = 0x12000, scoped, tag = 'internal scratch']
  #allocation2 [shape = 'f32[8,128]{1,0:T(8,128)}', space=vmem, size = 0x1000, scoped, tag = 'scratch operand']
  %s0 = inlined_call_operand.vmem [shape: f32[8,128], index: 0, kind: input, shape index: {}]
  %s1 = inlined_call_operand.hbm [shape: bf16[128,128], index: 1, kind: input, shape index: {}]
  %s2 = inlined_call_operand.vmem [shape: f32[1,128], index: 2, kind: input, shape index: {}]
  %s3 = inlined_call_operand.vmem [shape: f32[1,128], index: 3, kind: input, shape index: {}]
  %s4 = inlined_call_operand.vmem [shape: bf16[8,128], index: 4, kind: output, shape index: {}]
  %s5 = sld [smem:[#allocation0]]
  $region38: #{_lambda_.3} parent=0
    _
  %s7 = ssub.s32 1, %s5
  %s8 = scalar_select 0, %s7, %s5
  $region1: #{_lambda_.3} parent=0
    #allocation3 [shape = 'u8[32768]{0}', space=vmem, size = 0x8000, scoped, tag = 'input window, operand 1, single buffered']
    #allocation4 [shape = 's32[1]{0}', space=sflag, size = 0x4, scoped, tag = 'scoped memory for _lambda_.3']
    %9 = vsyncpa [#allocation4], 0
    // Predicated region
    $region2: #{_lambda_.3} parent=1 // pred_check
      _
    $region3: #{_lambda_.3} parent=1 // pred_check_branch
      %11 = sbr.rel (0) target = $region5
    $region4: #{_lambda_.3} parent=1 // pred_region
      _
    $region5: #{_lambda_.3} parent=1 // pred_fallthru
      _
    // Predicated region
    $region6: #{_lambda_.3} parent=1 // pred_check
      _
    $region7: #{_lambda_.3} parent=1 // pred_check_branch
      %13 = sbr.rel (0) target = $region9
    $region8: #{_lambda_.3} parent=1 // pred_region
      %s15 = ssub.s32 1024, 1024
      %16 = vsyncadd [#allocation4], %s15
      %s17 = sshll.u32 [#allocation3], 4
      %s18 = int_to_ptr.vmem [resolvable:$true] %s17
      %23 = dma.hbm_to_vmem [thread:$0]  %s1, 1024, %s18, [#allocation4], 64, 64, 4
    $region9: #{_lambda_.3} parent=1 // pred_fallthru
      _
    // Predicated region
    $region10: #{_lambda_.3} parent=1 // pred_check
      _
    $region11: #{_lambda_.3} parent=1 // pred_check_branch
      %25 = sbr.rel (0) target = $region13
    $region12: #{_lambda_.3} parent=1 // pred_region
      _
    $region13: #{_lambda_.3} parent=1 // pred_fallthru
      _
    // Predicated region
    $region14: #{_lambda_.3} parent=1 // pred_check
      _
    $region15: #{_lambda_.3} parent=1 // pred_check_branch
      %27 = sbr.rel (0) target = $region17
    $region16: #{_lambda_.3} parent=1 // pred_region
      _
    $region17: #{_lambda_.3} parent=1 // pred_fallthru
      _
    // Predicated region
    $region18: #{_lambda_.3} parent=1 // pred_check
      _
    $region19: #{_lambda_.3} parent=1 // pred_check_branch
      %29 = sbr.rel (0) target = $region21
    $region20: #{_lambda_.3} parent=1 // pred_region
      %30 = dma.done [#allocation4], 1024
    $region21: #{_lambda_.3} parent=1 // pred_fallthru
      _
    %p32 = scmp.eq.s32.totalorder 0, 0
    // Predicated region
    $region22: #{_lambda_.3} parent=1 // pred_check
      %p33 = pneg %p32
    $region23: #{_lambda_.3} parent=1 // pred_check_branch
      %35 = sbr.rel (%p33) target = $region25
    $region24: #{_lambda_.3} parent=1 // pred_region
      %36 = vst [vmem:[#allocation2] sm:$0xff] 0.0
    $region25: #{_lambda_.3} parent=1 // pred_fallthru
      _
    %v37 = vld [vmem:[#allocation2] sm:$0xff]
    %v38 = vld [vmem:[%s0] sm:$0xff]
    %v39 = vpack.c.bf16 %v38, %v38
    %v40 = vld [vmem:[#allocation3] sm:$0xf]
    %v41 = vld [vmem:[#allocation3 + $0x4] sm:$0xf]
    %v42 = vld [vmem:[#allocation3 + $0x8] sm:$0xf]
    %v43 = vld [vmem:[#allocation3 + $0xc] sm:$0xf]
    %v44 = vld [vmem:[#allocation3 + $0x10] sm:$0xf]
    %v45 = vld [vmem:[#allocation3 + $0x14] sm:$0xf]
    %v46 = vld [vmem:[#allocation3 + $0x18] sm:$0xf]
    %v47 = vld [vmem:[#allocation3 + $0x1c] sm:$0xf]
    %v48 = vld [vmem:[#allocation3 + $0x20] sm:$0xf]
    %v49 = vld [vmem:[#allocation3 + $0x24] sm:$0xf]
    %v50 = vld [vmem:[#allocation3 + $0x28] sm:$0xf]
    %v51 = vld [vmem:[#allocation3 + $0x2c] sm:$0xf]
    %v52 = vld [vmem:[#allocation3 + $0x30] sm:$0xf]
    %v53 = vld [vmem:[#allocation3 + $0x34] sm:$0xf]
    %v54 = vld [vmem:[#allocation3 + $0x38] sm:$0xf]
    %v55 = vld [vmem:[#allocation3 + $0x3c] sm:$0xf]
    %v72 = vunpack.c.l.b16 %v40
    %v73 = vunpack.c.l.b16 %v41
    %v74 = vunpack.c.l.b16 %v42
    %v75 = vunpack.c.l.b16 %v43
    %v76 = vunpack.c.l.b16 %v44
    %v77 = vunpack.c.l.b16 %v45
    %v78 = vunpack.c.l.b16 %v46
    %v79 = vunpack.c.l.b16 %v47
    %v80 = vunpack.c.l.b16 %v48
    %v81 = vunpack.c.l.b16 %v49
    %v82 = vunpack.c.l.b16 %v50
    %v83 = vunpack.c.l.b16 %v51
    %v84 = vunpack.c.l.b16 %v52
    %v85 = vunpack.c.l.b16 %v53
    %v86 = vunpack.c.l.b16 %v54
    %v87 = vunpack.c.l.b16 %v55
    %v88 = vpack.c.b16 %v73, %v72
    %v89 = vpack.c.b16 %v75, %v74
    %v90 = vpack.c.b16 %v77, %v76
    %v91 = vpack.c.b16 %v79, %v78
    %v92 = vpack.c.b16 %v81, %v80
    %v93 = vpack.c.b16 %v83, %v82
    %v94 = vpack.c.b16 %v85, %v84
    %v95 = vpack.c.b16 %v87, %v86
    %104 = vmatprep.subr.bf16.mxu0 0
    %105 = vmatpush1.bf16.msra.mxu0 %v88
    %106 = vmatprep.subr.bf16.mxu0 0
    %107 = vmatpush1.bf16.msra.mxu0 %v89
    %108 = vmatprep.subr.bf16.mxu0 0
    %109 = vmatpush1.bf16.msra.mxu0 %v90
    %110 = vmatprep.subr.bf16.mxu0 0
    %111 = vmatpush1.bf16.msra.mxu0 %v91
    %112 = vmatprep.subr.bf16.mxu0 0
    %113 = vmatpush1.bf16.msra.mxu0 %v92
    %114 = vmatprep.subr.bf16.mxu0 0
    %115 = vmatpush1.bf16.msra.mxu0 %v93
    %116 = vmatprep.subr.bf16.mxu0 0
    %117 = vmatpush1.bf16.msra.mxu0 %v94
    %118 = vmatprep.subr.bf16.mxu0 0
    %119 = vmatpush1.bf16.msra.mxu0 %v95
    %120 = vmatprep.subr.bf16.mxu0 0
    %121 = vmatpush1.bf16.msra.mxu0 0
    %122 = vmatprep.subr.bf16.mxu0 0
    %123 = vmatpush1.bf16.msra.mxu0 0
    %124 = vmatprep.subr.bf16.mxu0 0
    %125 = vmatpush1.bf16.msra.mxu0 0
    %126 = vmatprep.subr.bf16.mxu0 0
    %127 = vmatpush1.bf16.msra.mxu0 0
    %128 = vmatprep.subr.bf16.mxu0 0
    %129 = vmatpush1.bf16.msra.mxu0 0
    %130 = vmatprep.subr.bf16.mxu0 0
    %131 = vmatpush1.bf16.msra.mxu0 0
    %132 = vmatprep.subr.bf16.mxu0 0
    %133 = vmatpush1.bf16.msra.mxu0 0
    %134 = vmatprep.subr.bf16.mxu0 0
    %135 = vmatpush1.bf16.msra.mxu0 0
    %136 = vmatprep.mubr.bf16.mxu0 0
    %137 = vmatmul.mubr.bf16.gmra.mrb[0].mxu0 %v39
    %v138 = vpop.f32.mrb[0].mxu0
    %v139 = vadd.f32 0.0, %v138
    %v140 = vpop.f32.mrb[0].mxu0
    %v141 = vpop.f32.mrb[0].mxu0
    %v142 = vpop.f32.mrb[0].mxu0
    %143 = vdwg.mxu0
    %v144 = vadd.f32 %v37, %v139
    %145 = vst [vmem:[#allocation2] sm:$0xff] %v144
    // Predicated region
    $region26: #{_lambda_.3} parent=1 // pred_check
      %p146 = pneg %p32
    $region27: #{_lambda_.3} parent=1 // pred_check_branch
      %148 = sbr.rel (%p146) target = $region29
    $region28: #{_lambda_.3} parent=1 // pred_region
      %v149 = vld [vmem:[#allocation2] sm:$0xff]
      %v150 = vrot.slane %v149, 4
      %v151 = vadd.f32 %v149, %v150
      %v152 = vrot.slane %v151, 2
      %v153 = vadd.f32 %v151, %v152
      %v154 = vrot.slane %v153, 1
      %v155 = vadd.f32 %v153, %v154
      %v156 = vrcp.pop 8.0
      %v157 = vmul.f32 %v155, %v156
      %v158 = vsub.f32 %v149, %v157
      %v159 = vmul.f32 %v158, %v158
      %v160 = vrot.slane %v159, 4
      %v161 = vadd.f32 %v159, %v160
      %v162 = vrot.slane %v161, 2
      %v163 = vadd.f32 %v161, %v162
      %v164 = vrot.slane %v163, 1
      %v165 = vadd.f32 %v163, %v164
      %v166 = vmul.f32 %v165, %v156
      %v167 = vld [vmem:[%s2] sm:$0x1]
      %v168 = vadd.f32 %v166, 1e-05
      %v169 = vrsqrt.pop %v168
      %v170 = vmul.f32 %v167, %v169
      %v171 = vld [vmem:[%s3] sm:$0x1]
      %v172 = vmul.f32 %v170, %v157
      %v173 = vsub.f32 %v171, %v172
      %v175 = vlaneseq
      %v176 = vshrl.u32 %v175, 7
      %v177 = vsub.s32 0, %v176
      %v178 = vrot.slane %v170, %v177
      %v180 = vmul.f32 %v149, %v178
      %v182 = vlaneseq
      %v183 = vshrl.u32 %v182, 7
      %v184 = vsub.s32 0, %v183
      %v185 = vrot.slane %v173, %v184
      %v187 = vadd.f32 %v180, %v185
      %vm188 = vcmp.gt.f32.partialorder %v187, 0.0
      %v189 = vmul.f32 %v187, 0.1
      %v190 = vsel %vm188, %v187, %v189
      %v191 = vpack.c.bf16 %v190, %v190
      %192 = vst [vmem:[%s4] sm:$0xf] %v191
    $region29: #{_lambda_.3} parent=1 // pred_fallthru
      _
    // Predicated region
    $region30: #{_lambda_.3} parent=1 // pred_check
      _
    $region31: #{_lambda_.3} parent=1 // pred_check_branch
      %194 = sbr.rel (0) target = $region33
    $region32: #{_lambda_.3} parent=1 // pred_region
      _
    $region33: #{_lambda_.3} parent=1 // pred_fallthru
      _
    // Predicated region
    $region34: #{_lambda_.3} parent=1 // pred_check
      _
    $region35: #{_lambda_.3} parent=1 // pred_check_branch
      %196 = sbr.rel (0) target = $region37
    $region36: #{_lambda_.3} parent=1 // pred_region
      _
    $region37: #{_lambda_.3} parent=1 // pred_fallthru
      _
    %197 = vsyncpa [#allocation4], 1

// kernel: _lambda_.4
$region0: #{_lambda_.4}
  #allocation0 [shape = 'u32[]', space=smem, size = 0x4, offset = 0x4, fixed_abs, tag = 'smem constant byte address 0x4 - core index']
  #allocation1 [shape = 'u32[144,128]{1,0:T(1,128)}', space=vmem, size = 0x12000, scoped, tag = 'internal scratch']
  #allocation2 [shape = 'f32[8,128]{1,0:T(8,128)}', space=vmem, size = 0x1000, scoped, tag = 'scratch operand']
  %s0 = inlined_call_operand.vmem [shape: bf16[8,128], index: 0, kind: input, shape index: {}]
  %s1 = inlined_call_operand.vmem [shape: bf16[128,128], index: 1, kind: input, shape index: {}]
  %s2 = inlined_call_operand.vmem [shape: f32[1,128], index: 2, kind: input, shape index: {}]
  %s3 = inlined_call_operand.vmem [shape: f32[1,128], index: 3, kind: input, shape index: {}]
  %s4 = inlined_call_operand.vmem [shape: bf16[8,128], index: 4, kind: output, shape index: {}]
  %s5 = sld [smem:[#allocation0]]
  $region34: #{_lambda_.4} parent=0
    _
  %s7 = ssub.s32 1, %s5
  %s8 = scalar_select 0, %s7, %s5
  // Predicated region
  $region2: #{_lambda_.4} parent=0 // pred_check
    _
  $region3: #{_lambda_.4} parent=0 // pred_check_branch
    %10 = sbr.rel (0) target = $region5
  $region4: #{_lambda_.4} parent=0 // pred_region
    _
  $region5: #{_lambda_.4} parent=0 // pred_fallthru
    _
  // Predicated region
  $region6: #{_lambda_.4} parent=0 // pred_check
    _
  $region7: #{_lambda_.4} parent=0 // pred_check_branch
    %12 = sbr.rel (0) target = $region9
  $region8: #{_lambda_.4} parent=0 // pred_region
    _
  $region9: #{_lambda_.4} parent=0 // pred_fallthru
    _
  // Predicated region
  $region10: #{_lambda_.4} parent=0 // pred_check
    _
  $region11: #{_lambda_.4} parent=0 // pred_check_branch
    %14 = sbr.rel (0) target = $region13
  $region12: #{_lambda_.4} parent=0 // pred_region
    _
  $region13: #{_lambda_.4} parent=0 // pred_fallthru
    _
  // Predicated region
  $region14: #{_lambda_.4} parent=0 // pred_check
    _
  $region15: #{_lambda_.4} parent=0 // pred_check_branch
    %16 = sbr.rel (0) target = $region17
  $region16: #{_lambda_.4} parent=0 // pred_region
    _
  $region17: #{_lambda_.4} parent=0 // pred_fallthru
    _
  %p18 = scmp.eq.s32.totalorder 0, 0
  // Predicated region
  $region18: #{_lambda_.4} parent=0 // pred_check
    %p19 = pneg %p18
  $region19: #{_lambda_.4} parent=0 // pred_check_branch
    %21 = sbr.rel (%p19) target = $region21
  $region20: #{_lambda_.4} parent=0 // pred_region
    %22 = vst [vmem:[#allocation2] sm:$0xff] 0.0
  $region21: #{_lambda_.4} parent=0 // pred_fallthru
    _
  %v23 = vld [vmem:[#allocation2] sm:$0xff]
  %v24 = vld [vmem:[%s0] sm:$0xf]
  %v25 = vld [vmem:[%s1] sm:$0xf]
  %v26 = vld [vmem:[%s1 + $0x4] sm:$0xf]
  %v27 = vld [vmem:[%s1 + $0x8] sm:$0xf]
  %v28 = vld [vmem:[%s1 + $0xc] sm:$0xf]
  %v29 = vld [vmem:[%s1 + $0x10] sm:$0xf]
  %v30 = vld [vmem:[%s1 + $0x14] sm:$0xf]
  %v31 = vld [vmem:[%s1 + $0x18] sm:$0xf]
  %v32 = vld [vmem:[%s1 + $0x1c] sm:$0xf]
  %v33 = vld [vmem:[%s1 + $0x20] sm:$0xf]
  %v34 = vld [vmem:[%s1 + $0x24] sm:$0xf]
  %v35 = vld [vmem:[%s1 + $0x28] sm:$0xf]
  %v36 = vld [vmem:[%s1 + $0x2c] sm:$0xf]
  %v37 = vld [vmem:[%s1 + $0x30] sm:$0xf]
  %v38 = vld [vmem:[%s1 + $0x34] sm:$0xf]
  %v39 = vld [vmem:[%s1 + $0x38] sm:$0xf]
  %v40 = vld [vmem:[%s1 + $0x3c] sm:$0xf]
  %v57 = vunpack.c.l.b16 %v25
  %v58 = vunpack.c.l.b16 %v26
  %v59 = vunpack.c.l.b16 %v27
  %v60 = vunpack.c.l.b16 %v28
  %v61 = vunpack.c.l.b16 %v29
  %v62 = vunpack.c.l.b16 %v30
  %v63 = vunpack.c.l.b16 %v31
  %v64 = vunpack.c.l.b16 %v32
  %v65 = vunpack.c.l.b16 %v33
  %v66 = vunpack.c.l.b16 %v34
  %v67 = vunpack.c.l.b16 %v35
  %v68 = vunpack.c.l.b16 %v36
  %v69 = vunpack.c.l.b16 %v37
  %v70 = vunpack.c.l.b16 %v38
  %v71 = vunpack.c.l.b16 %v39
  %v72 = vunpack.c.l.b16 %v40
  %v73 = vpack.c.b16 %v58, %v57
  %v74 = vpack.c.b16 %v60, %v59
  %v75 = vpack.c.b16 %v62, %v61
  %v76 = vpack.c.b16 %v64, %v63
  %v77 = vpack.c.b16 %v66, %v65
  %v78 = vpack.c.b16 %v68, %v67
  %v79 = vpack.c.b16 %v70, %v69
  %v80 = vpack.c.b16 %v72, %v71
  %89 = vmatprep.subr.bf16.mxu0 0
  %90 = vmatpush1.bf16.msra.mxu0 %v73
  %91 = vmatprep.subr.bf16.mxu0 0
  %92 = vmatpush1.bf16.msra.mxu0 %v74
  %93 = vmatprep.subr.bf16.mxu0 0
  %94 = vmatpush1.bf16.msra.mxu0 %v75
  %95 = vmatprep.subr.bf16.mxu0 0
  %96 = vmatpush1.bf16.msra.mxu0 %v76
  %97 = vmatprep.subr.bf16.mxu0 0
  %98 = vmatpush1.bf16.msra.mxu0 %v77
  %99 = vmatprep.subr.bf16.mxu0 0
  %100 = vmatpush1.bf16.msra.mxu0 %v78
  %101 = vmatprep.subr.bf16.mxu0 0
  %102 = vmatpush1.bf16.msra.mxu0 %v79
  %103 = vmatprep.subr.bf16.mxu0 0
  %104 = vmatpush1.bf16.msra.mxu0 %v80
  %105 = vmatprep.subr.bf16.mxu0 0
  %106 = vmatpush1.bf16.msra.mxu0 0
  %107 = vmatprep.subr.bf16.mxu0 0
  %108 = vmatpush1.bf16.msra.mxu0 0
  %109 = vmatprep.subr.bf16.mxu0 0
  %110 = vmatpush1.bf16.msra.mxu0 0
  %111 = vmatprep.subr.bf16.mxu0 0
  %112 = vmatpush1.bf16.msra.mxu0 0
  %113 = vmatprep.subr.bf16.mxu0 0
  %114 = vmatpush1.bf16.msra.mxu0 0
  %115 = vmatprep.subr.bf16.mxu0 0
  %116 = vmatpush1.bf16.msra.mxu0 0
  %117 = vmatprep.subr.bf16.mxu0 0
  %118 = vmatpush1.bf16.msra.mxu0 0
  %119 = vmatprep.subr.bf16.mxu0 0
  %120 = vmatpush1.bf16.msra.mxu0 0
  %121 = vmatprep.mubr.bf16.mxu0 0
  %122 = vmatmul.mubr.bf16.gmra.mrb[0].mxu0 %v24
  %v123 = vpop.f32.mrb[0].mxu0
  %v124 = vadd.f32 0.0, %v123
  %v125 = vpop.f32.mrb[0].mxu0
  %v126 = vpop.f32.mrb[0].mxu0
  %v127 = vpop.f32.mrb[0].mxu0
  %128 = vdwg.mxu0
  %v129 = vadd.f32 %v23, %v124
  %130 = vst [vmem:[#allocation2] sm:$0xff] %v129
  // Predicated region
  $region22: #{_lambda_.4} parent=0 // pred_check
    %p131 = pneg %p18
  $region23: #{_lambda_.4} parent=0 // pred_check_branch
    %133 = sbr.rel (%p131) target = $region25
  $region24: #{_lambda_.4} parent=0 // pred_region
    %v134 = vld [vmem:[#allocation2] sm:$0xff]
    %v135 = vrot.slane %v134, 4
    %v136 = vadd.f32 %v134, %v135
    %v137 = vrot.slane %v136, 2
    %v138 = vadd.f32 %v136, %v137
    %v139 = vrot.slane %v138, 1
    %v140 = vadd.f32 %v138, %v139
    %v141 = vrcp.pop 8.0
    %v142 = vmul.f32 %v140, %v141
    %v143 = vsub.f32 %v134, %v142
    %v144 = vmul.f32 %v143, %v143
    %v145 = vrot.slane %v144, 4
    %v146 = vadd.f32 %v144, %v145
    %v147 = vrot.slane %v146, 2
    %v148 = vadd.f32 %v146, %v147
    %v149 = vrot.slane %v148, 1
    %v150 = vadd.f32 %v148, %v149
    %v151 = vmul.f32 %v150, %v141
    %v152 = vld [vmem:[%s2] sm:$0x1]
    %v153 = vadd.f32 %v151, 1e-05
    %v154 = vrsqrt.pop %v153
    %v155 = vmul.f32 %v152, %v154
    %v156 = vld [vmem:[%s3] sm:$0x1]
    %v157 = vmul.f32 %v155, %v142
    %v158 = vsub.f32 %v156, %v157
    %v160 = vlaneseq
    %v161 = vshrl.u32 %v160, 7
    %v162 = vsub.s32 0, %v161
    %v163 = vrot.slane %v155, %v162
    %v165 = vmul.f32 %v134, %v163
    %v167 = vlaneseq
    %v168 = vshrl.u32 %v167, 7
    %v169 = vsub.s32 0, %v168
    %v170 = vrot.slane %v158, %v169
    %v172 = vadd.f32 %v165, %v170
    %vm173 = vcmp.gt.f32.partialorder %v172, 0.0
    %v174 = vmul.f32 %v172, 0.1
    %v175 = vsel %vm173, %v172, %v174
    %v176 = vpack.c.bf16 %v175, %v175
    %177 = vst [vmem:[%s4] sm:$0xf] %v176
  $region25: #{_lambda_.4} parent=0 // pred_fallthru
    _
  // Predicated region
  $region26: #{_lambda_.4} parent=0 // pred_check
    _
  $region27: #{_lambda_.4} parent=0 // pred_check_branch
    %179 = sbr.rel (0) target = $region29
  $region28: #{_lambda_.4} parent=0 // pred_region
    _
  $region29: #{_lambda_.4} parent=0 // pred_fallthru
    _
  // Predicated region
  $region30: #{_lambda_.4} parent=0 // pred_check
    _
  $region31: #{_lambda_.4} parent=0 // pred_check_branch
    %181 = sbr.rel (0) target = $region33
  $region32: #{_lambda_.4} parent=0 // pred_region
    _
  $region33: #{_lambda_.4} parent=0 // pred_fallthru
    _

</llo_original>
